<compile_context>
chip_gen: v5e
topology: v5e:2x2
jax: 0.10.0
libtpu: 0.0.40
codegen_flags: <defaults>
</compile_context>

<pallas_src>
import functools

import jax
import jax.numpy as jnp
from jax import lax
from jax.experimental import pallas as pl
from jax.experimental.pallas import tpu as pltpu


def _resblock_kernel(x_ref, w_ref, m_ref, o_ref, patches_ref, *,
                     H, W, C, Cp, Bt, neg_slope):
    """Fused 3x3 same-conv (no bias) + LeakyReLU + residual add.

    x_ref       : (Bt, C, H*W)   flattened NCHW images (f32)
    w_ref       : (C, 9*Cp)      bf16 weights, cols = (tap, c_in) with c_in
                                 zero-padded to Cp per tap
    m_ref       : (9, H*W)       f32 {0,1} padding masks, one row per tap
    o_ref       : (Bt, C, H*W)   output
    patches_ref : (9*Cp, Bt*H*W) bf16 im2col scratch (sublane-aligned per tap)
    """
    HW = H * W

    # Zero the scratch once so the zero-padded channel rows (C..Cp-1 of every
    # tap) are guaranteed zero (their weight columns are zero; this only
    # guards against stale-VMEM NaN/Inf). Valid rows are overwritten below.
    @pl.when(pl.program_id(0) == 0)
    def _():
        patches_ref[...] = jnp.zeros_like(patches_ref)

    xs = []
    for b in range(Bt):                                # static unrolled loop
        x_b = x_ref[b].astype(jnp.float32)             # (C, HW); read once,
        xs.append(x_b)                                 # also the residual
        for kh in range(3):
            for kw in range(3):
                dy, dx = kh - 1, kw - 1
                t = kh * 3 + kw
                s = dy * W + dx                        # flat source offset
                if s == 0:
                    tap = x_b                          # center tap: no shift/mask
                else:
                    # XLU lane-roll so out[i] = x[i + s]; the precomputed mask
                    # zeroes positions whose source pixel is outside the image
                    # (reproduces padding=1 exactly, incl. wrap-around).
                    shifted = pltpu.roll(x_b, shift=(-s) % HW, axis=1)
                    tap = shifted * m_ref[t:t + 1, :]  # (C,HW) * (1,HW)
                patches_ref[t * Cp:t * Cp + C, b * HW:(b + 1) * HW] = (
                    tap.astype(patches_ref.dtype))

    # One MXU matmul for all Bt images:
    #   (C, 9*Cp) x (9*Cp, Bt*HW) -> (C, Bt*HW), bf16 operands, f32 accumulate.
    acc = jnp.dot(w_ref[...], patches_ref[...],
                  preferred_element_type=jnp.float32)

    for b in range(Bt):
        y = acc[:, b * HW:(b + 1) * HW]                # lane-aligned slice
        y = jnp.where(y > 0, y, neg_slope * y)         # LeakyReLU (f32)
        o_ref[b] = (xs[b] + y).astype(o_ref.dtype)     # residual add (f32)


def resblock_forward(x_nchw, weight_oihw, *, neg_slope=0.01, batch_tile=None):
    """x_nchw: (B, C, H, W); weight_oihw: (C, C, 3, 3) (PyTorch Conv2d OIHW)."""
    B, C, H, W = x_nchw.shape
    HW = H * W
    # TODO(synk): for general shapes pad H*W up to a multiple of 128 instead of
    # asserting, so output stores never become masked partial stores.
    assert HW % 128 == 0, "H*W must be a multiple of 128"

    Cp = -(-C // 8) * 8                      # per-tap channel block, 8-aligned
    if batch_tile is None:
        batch_tile = max(1, min(B, -(-8 // C)))   # aim for Bt*C >= 8
        while B % batch_tile:
            batch_tile -= 1
    Bt = batch_tile
    assert B % Bt == 0

    # Free reshape: NCHW is already contiguous as (B, C, H*W).
    x_flat = x_nchw.reshape(B, C, HW)

    # (Cout, Cin, kh, kw) -> (Cout, tap, Cin) -> zero-pad Cin to Cp -> bf16.
    w_t = jnp.transpose(weight_oihw, (0, 2, 3, 1)).reshape(C, 9, C)
    w2p = jnp.zeros((C, 9, Cp), jnp.float32).at[:, :, :C].set(
        w_t.astype(jnp.float32))
    w2p = w2p.reshape(C, 9 * Cp).astype(jnp.bfloat16)

    # Static padding=1 boundary masks, hoisted out of the kernel (one row per
    # tap); only the row/col tests that can actually fail are included.
    flat = jnp.arange(HW, dtype=jnp.int32)
    row, col = flat // W, flat % W
    masks = []
    for kh in range(3):
        for kw in range(3):
            dy, dx = kh - 1, kw - 1
            valid = jnp.ones((HW,), jnp.bool_)
            if dy != 0:
                valid = valid & (row + dy >= 0) & (row + dy < H)
            if dx != 0:
                valid = valid & (col + dx >= 0) & (col + dx < W)
            masks.append(valid)
    masks = jnp.stack(masks).astype(jnp.float32)        # (9, HW)

    kernel = functools.partial(_resblock_kernel, H=H, W=W, C=C, Cp=Cp, Bt=Bt,
                               neg_slope=neg_slope)

    out_flat = pl.pallas_call(
        kernel,
        out_shape=jax.ShapeDtypeStruct((B, C, HW), x_nchw.dtype),
        grid_spec=pltpu.PrefetchScalarGridSpec(
            num_scalar_prefetch=0,
            grid=(B // Bt,),
            in_specs=[
                pl.BlockSpec((Bt, C, HW), lambda i: (i, 0, 0)),
                pl.BlockSpec((C, 9 * Cp), lambda i: (0, 0)),
                pl.BlockSpec((9, HW), lambda i: (0, 0)),
            ],
            out_specs=pl.BlockSpec((Bt, C, HW), lambda i: (i, 0, 0)),
            scratch_shapes=[pltpu.VMEM((9 * Cp, Bt * HW), jnp.bfloat16)],
        ),
        compiler_params=pltpu.CompilerParams(
            dimension_semantics=("parallel",)),
    )(x_flat, w2p, masks)

    return out_flat.reshape(B, C, H, W)


def _reference(x_nchw, weight_oihw, neg_slope=0.01,
               operand_dtype=jnp.float32):
    """Plain-JAX reference; operand_dtype lets us model the bf16 matmul path."""
    y = lax.conv_general_dilated(
        x_nchw.astype(operand_dtype),
        weight_oihw.astype(operand_dtype),
        window_strides=(1, 1),
        padding=((1, 1), (1, 1)),
        dimension_numbers=("NCHW", "OIHW", "NCHW"),
        preferred_element_type=jnp.float32,
    )
    y = jnp.where(y > 0, y, neg_slope * y)
    return (x_nchw.astype(jnp.float32) + y).astype(x_nchw.dtype)


if __name__ == "__main__":
    key = jax.random.PRNGKey(0)
    kx, kw = jax.random.split(key)

    B, C, H, W = 2, 4, 16, 16          # ResBlock(n=4) on a (2, 4, 16, 16) input
    x = jax.random.normal(kx, (B, C, H, W), dtype=jnp.float32)

    # Deterministic weight init matching nn.Conv2d(n, n, 3, bias=False), OIHW.
    fan_in = C * 3 * 3
    bound = 1.0 / jnp.sqrt(fan_in)
    weight = jax.random.uniform(kw, (C, C, 3, 3), dtype=jnp.float32,
                                minval=-bound, maxval=bound)

    out = jax.block_until_ready(resblock_forward(x, weight))
    assert out.shape == (B, C, H, W)

    # Tight check against a reference whose conv operands are also rounded to
    # bf16 (same operand values, f32 accumulation -> near-exact match).
    ref_bf16 = _reference(x, weight, operand_dtype=jnp.bfloat16)
    assert jnp.allclose(out, ref_bf16, atol=1e-4, rtol=1e-3), \
        "mismatch vs bf16-operand reference"

    # Loose check against the exact f32 reference (bf16 operand rounding only).
    ref_f32 = _reference(x, weight, operand_dtype=jnp.float32)
    assert jnp.allclose(out, ref_f32, atol=5e-2, rtol=5e-2), \
        "mismatch vs f32 reference"

    print("KERNEL_OK")
</pallas_src>

<mosaic_0001>
module attributes {stable_mosaic.version = 11 : i64} {
  func.func @_resblock_kernel(%arg0: i32, %arg1: memref<2x4x256xf32, #tpu.memory_space<vmem>>, %arg2: memref<4x72xbf16, #tpu.memory_space<vmem>>, %arg3: memref<9x256xf32, #tpu.memory_space<vmem>>, %arg4: memref<2x4x256xf32, #tpu.memory_space<vmem>>, %arg5: memref<72x512xbf16, #tpu.memory_space<vmem>>) attributes {dimension_semantics = [#tpu.dimension_semantics<parallel>], iteration_bounds = array<i64: 1>, scalar_prefetch = 0 : i64, scratch_operands = 1 : i64, tpu.core_type = #tpu.core_type<tc>, window_params = [{transform_indices = @transform_0, window_bounds = array<i64: 2, 4, 256>}, {pipeline_mode = #tpu.pipeline_mode<synchronous>, transform_indices = @transform_1, window_bounds = array<i64: 4, 72>}, {pipeline_mode = #tpu.pipeline_mode<synchronous>, transform_indices = @transform_2, window_bounds = array<i64: 9, 256>}, {transform_indices = @transform_3, window_bounds = array<i64: 2, 4, 256>}]} {
    %c0_i32 = arith.constant 0 : i32
    %0 = arith.cmpi eq, %arg0, %c0_i32 : i32
    %1 = arith.extui %0 : i1 to i32
    %c0_i32_0 = arith.constant 0 : i32
    %2 = arith.cmpi ne, %1, %c0_i32_0 : i32
    scf.if %2 {
      %cst_81 = arith.constant 0.000000e+00 : bf16
      %130 = vector.broadcast %cst_81 : bf16 to vector<72x512xbf16>
      %c0_82 = arith.constant 0 : index
      %c0_83 = arith.constant 0 : index
      %131 = vector.load %arg5[%c0_82, %c0_83] : memref<72x512xbf16, #tpu.memory_space<vmem>>, vector<72x512xbf16>
      tpu.vector_store %arg5[%c0_82, %c0_83], %130 {strides = array<i32>} : memref<72x512xbf16, #tpu.memory_space<vmem>>, vector<72x512xbf16>,
    } else {
    }
    %c0 = arith.constant 0 : index
    %c0_1 = arith.constant 0 : index
    %c0_2 = arith.constant 0 : index
    %3 = vector.load %arg1[%c0, %c0_1, %c0_2] : memref<2x4x256xf32, #tpu.memory_space<vmem>>, vector<1x4x256xf32>
    %4 = vector.shape_cast %3 : vector<1x4x256xf32> to vector<4x256xf32>
    %c17_i32 = arith.constant 17 : i32
    %5 = tpu.dynamic_rotate %4 by %c17_i32 dim 1 : vector<4x256xf32>, i32 -> vector<4x256xf32>
    %c0_3 = arith.constant 0 : index
    %c0_4 = arith.constant 0 : index
    %6 = vector.load %arg3[%c0_3, %c0_4] : memref<9x256xf32, #tpu.memory_space<vmem>>, vector<1x256xf32>
    %7 = vector.broadcast %6 : vector<1x256xf32> to vector<4x256xf32>
    %8 = arith.mulf %5, %7 : vector<4x256xf32>
    %9 = arith.truncf %8 : vector<4x256xf32> to vector<4x256xbf16>
    %c0_5 = arith.constant 0 : index
    %c0_6 = arith.constant 0 : index
    %10 = vector.load %arg5[%c0_5, %c0_6] : memref<72x512xbf16, #tpu.memory_space<vmem>>, vector<4x256xbf16>
    tpu.vector_store %arg5[%c0_5, %c0_6], %9 {strides = array<i32>} : memref<72x512xbf16, #tpu.memory_space<vmem>>, vector<4x256xbf16>,
    %c16_i32 = arith.constant 16 : i32
    %11 = tpu.dynamic_rotate %4 by %c16_i32 dim 1 : vector<4x256xf32>, i32 -> vector<4x256xf32>
    %c1 = arith.constant 1 : index
    %c0_7 = arith.constant 0 : index
    %12 = vector.load %arg3[%c1, %c0_7] : memref<9x256xf32, #tpu.memory_space<vmem>>, vector<1x256xf32>
    %13 = vector.broadcast %12 : vector<1x256xf32> to vector<4x256xf32>
    %14 = arith.mulf %11, %13 : vector<4x256xf32>
    %15 = arith.truncf %14 : vector<4x256xf32> to vector<4x256xbf16>
    %c8 = arith.constant 8 : index
    %c0_8 = arith.constant 0 : index
    %16 = vector.load %arg5[%c8, %c0_8] : memref<72x512xbf16, #tpu.memory_space<vmem>>, vector<4x256xbf16>
    tpu.vector_store %arg5[%c8, %c0_8], %15 {strides = array<i32>} : memref<72x512xbf16, #tpu.memory_space<vmem>>, vector<4x256xbf16>,
    %c15_i32 = arith.constant 15 : i32
    %17 = tpu.dynamic_rotate %4 by %c15_i32 dim 1 : vector<4x256xf32>, i32 -> vector<4x256xf32>
    %c2 = arith.constant 2 : index
    %c0_9 = arith.constant 0 : index
    %18 = vector.load %arg3[%c2, %c0_9] : memref<9x256xf32, #tpu.memory_space<vmem>>, vector<1x256xf32>
    %19 = vector.broadcast %18 : vector<1x256xf32> to vector<4x256xf32>
    %20 = arith.mulf %17, %19 : vector<4x256xf32>
    %21 = arith.truncf %20 : vector<4x256xf32> to vector<4x256xbf16>
    %c16 = arith.constant 16 : index
    %c0_10 = arith.constant 0 : index
    %22 = vector.load %arg5[%c16, %c0_10] : memref<72x512xbf16, #tpu.memory_space<vmem>>, vector<4x256xbf16>
    tpu.vector_store %arg5[%c16, %c0_10], %21 {strides = array<i32>} : memref<72x512xbf16, #tpu.memory_space<vmem>>, vector<4x256xbf16>,
    %c1_i32 = arith.constant 1 : i32
    %23 = tpu.dynamic_rotate %4 by %c1_i32 dim 1 : vector<4x256xf32>, i32 -> vector<4x256xf32>
    %c3 = arith.constant 3 : index
    %c0_11 = arith.constant 0 : index
    %24 = vector.load %arg3[%c3, %c0_11] : memref<9x256xf32, #tpu.memory_space<vmem>>, vector<1x256xf32>
    %25 = vector.broadcast %24 : vector<1x256xf32> to vector<4x256xf32>
    %26 = arith.mulf %23, %25 : vector<4x256xf32>
    %27 = arith.truncf %26 : vector<4x256xf32> to vector<4x256xbf16>
    %c24 = arith.constant 24 : index
    %c0_12 = arith.constant 0 : index
    %28 = vector.load %arg5[%c24, %c0_12] : memref<72x512xbf16, #tpu.memory_space<vmem>>, vector<4x256xbf16>
    tpu.vector_store %arg5[%c24, %c0_12], %27 {strides = array<i32>} : memref<72x512xbf16, #tpu.memory_space<vmem>>, vector<4x256xbf16>,
    %29 = arith.truncf %4 : vector<4x256xf32> to vector<4x256xbf16>
    %c32 = arith.constant 32 : index
    %c0_13 = arith.constant 0 : index
    %30 = vector.load %arg5[%c32, %c0_13] : memref<72x512xbf16, #tpu.memory_space<vmem>>, vector<4x256xbf16>
    tpu.vector_store %arg5[%c32, %c0_13], %29 {strides = array<i32>} : memref<72x512xbf16, #tpu.memory_space<vmem>>, vector<4x256xbf16>,
    %c255_i32 = arith.constant 255 : i32
    %31 = tpu.dynamic_rotate %4 by %c255_i32 dim 1 : vector<4x256xf32>, i32 -> vector<4x256xf32>
    %c5 = arith.constant 5 : index
    %c0_14 = arith.constant 0 : index
    %32 = vector.load %arg3[%c5, %c0_14] : memref<9x256xf32, #tpu.memory_space<vmem>>, vector<1x256xf32>
    %33 = vector.broadcast %32 : vector<1x256xf32> to vector<4x256xf32>
    %34 = arith.mulf %31, %33 : vector<4x256xf32>
    %35 = arith.truncf %34 : vector<4x256xf32> to vector<4x256xbf16>
    %c40 = arith.constant 40 : index
    %c0_15 = arith.constant 0 : index
    %36 = vector.load %arg5[%c40, %c0_15] : memref<72x512xbf16, #tpu.memory_space<vmem>>, vector<4x256xbf16>
    tpu.vector_store %arg5[%c40, %c0_15], %35 {strides = array<i32>} : memref<72x512xbf16, #tpu.memory_space<vmem>>, vector<4x256xbf16>,
    %c241_i32 = arith.constant 241 : i32
    %37 = tpu.dynamic_rotate %4 by %c241_i32 dim 1 : vector<4x256xf32>, i32 -> vector<4x256xf32>
    %c6 = arith.constant 6 : index
    %c0_16 = arith.constant 0 : index
    %38 = vector.load %arg3[%c6, %c0_16] : memref<9x256xf32, #tpu.memory_space<vmem>>, vector<1x256xf32>
    %39 = vector.broadcast %38 : vector<1x256xf32> to vector<4x256xf32>
    %40 = arith.mulf %37, %39 : vector<4x256xf32>
    %41 = arith.truncf %40 : vector<4x256xf32> to vector<4x256xbf16>
    %c48 = arith.constant 48 : index
    %c0_17 = arith.constant 0 : index
    %42 = vector.load %arg5[%c48, %c0_17] : memref<72x512xbf16, #tpu.memory_space<vmem>>, vector<4x256xbf16>
    tpu.vector_store %arg5[%c48, %c0_17], %41 {strides = array<i32>} : memref<72x512xbf16, #tpu.memory_space<vmem>>, vector<4x256xbf16>,
    %c240_i32 = arith.constant 240 : i32
    %43 = tpu.dynamic_rotate %4 by %c240_i32 dim 1 : vector<4x256xf32>, i32 -> vector<4x256xf32>
    %c7 = arith.constant 7 : index
    %c0_18 = arith.constant 0 : index
    %44 = vector.load %arg3[%c7, %c0_18] : memref<9x256xf32, #tpu.memory_space<vmem>>, vector<1x256xf32>
    %45 = vector.broadcast %44 : vector<1x256xf32> to vector<4x256xf32>
    %46 = arith.mulf %43, %45 : vector<4x256xf32>
    %47 = arith.truncf %46 : vector<4x256xf32> to vector<4x256xbf16>
    %c56 = arith.constant 56 : index
    %c0_19 = arith.constant 0 : index
    %48 = vector.load %arg5[%c56, %c0_19] : memref<72x512xbf16, #tpu.memory_space<vmem>>, vector<4x256xbf16>
    tpu.vector_store %arg5[%c56, %c0_19], %47 {strides = array<i32>} : memref<72x512xbf16, #tpu.memory_space<vmem>>, vector<4x256xbf16>,
    %c239_i32 = arith.constant 239 : i32
    %49 = tpu.dynamic_rotate %4 by %c239_i32 dim 1 : vector<4x256xf32>, i32 -> vector<4x256xf32>
    %c8_20 = arith.constant 8 : index
    %c0_21 = arith.constant 0 : index
    %50 = vector.load %arg3[%c8_20, %c0_21] : memref<9x256xf32, #tpu.memory_space<vmem>>, vector<1x256xf32>
    %51 = vector.broadcast %50 : vector<1x256xf32> to vector<4x256xf32>
    %52 = arith.mulf %49, %51 : vector<4x256xf32>
    %53 = arith.truncf %52 : vector<4x256xf32> to vector<4x256xbf16>
    %c64 = arith.constant 64 : index
    %c0_22 = arith.constant 0 : index
    %54 = vector.load %arg5[%c64, %c0_22] : memref<72x512xbf16, #tpu.memory_space<vmem>>, vector<4x256xbf16>
    tpu.vector_store %arg5[%c64, %c0_22], %53 {strides = array<i32>} : memref<72x512xbf16, #tpu.memory_space<vmem>>, vector<4x256xbf16>,
    %c1_23 = arith.constant 1 : index
    %c0_24 = arith.constant 0 : index
    %c0_25 = arith.constant 0 : index
    %55 = vector.load %arg1[%c1_23, %c0_24, %c0_25] : memref<2x4x256xf32, #tpu.memory_space<vmem>>, vector<1x4x256xf32>
    %56 = vector.shape_cast %55 : vector<1x4x256xf32> to vector<4x256xf32>
    %c17_i32_26 = arith.constant 17 : i32
    %57 = tpu.dynamic_rotate %56 by %c17_i32_26 dim 1 : vector<4x256xf32>, i32 -> vector<4x256xf32>
    %c0_27 = arith.constant 0 : index
    %c0_28 = arith.constant 0 : index
    %58 = vector.load %arg3[%c0_27, %c0_28] : memref<9x256xf32, #tpu.memory_space<vmem>>, vector<1x256xf32>
    %59 = vector.broadcast %58 : vector<1x256xf32> to vector<4x256xf32>
    %60 = arith.mulf %57, %59 : vector<4x256xf32>
    %61 = arith.truncf %60 : vector<4x256xf32> to vector<4x256xbf16>
    %c0_29 = arith.constant 0 : index
    %c256 = arith.constant 256 : index
    %62 = vector.load %arg5[%c0_29, %c256] : memref<72x512xbf16, #tpu.memory_space<vmem>>, vector<4x256xbf16>
    tpu.vector_store %arg5[%c0_29, %c256], %61 {strides = array<i32>} : memref<72x512xbf16, #tpu.memory_space<vmem>>, vector<4x256xbf16>,
    %c16_i32_30 = arith.constant 16 : i32
    %63 = tpu.dynamic_rotate %56 by %c16_i32_30 dim 1 : vector<4x256xf32>, i32 -> vector<4x256xf32>
    %c1_31 = arith.constant 1 : index
    %c0_32 = arith.constant 0 : index
    %64 = vector.load %arg3[%c1_31, %c0_32] : memref<9x256xf32, #tpu.memory_space<vmem>>, vector<1x256xf32>
    %65 = vector.broadcast %64 : vector<1x256xf32> to vector<4x256xf32>
    %66 = arith.mulf %63, %65 : vector<4x256xf32>
    %67 = arith.truncf %66 : vector<4x256xf32> to vector<4x256xbf16>
    %c8_33 = arith.constant 8 : index
    %c256_34 = arith.constant 256 : index
    %68 = vector.load %arg5[%c8_33, %c256_34] : memref<72x512xbf16, #tpu.memory_space<vmem>>, vector<4x256xbf16>
    tpu.vector_store %arg5[%c8_33, %c256_34], %67 {strides = array<i32>} : memref<72x512xbf16, #tpu.memory_space<vmem>>, vector<4x256xbf16>,
    %c15_i32_35 = arith.constant 15 : i32
    %69 = tpu.dynamic_rotate %56 by %c15_i32_35 dim 1 : vector<4x256xf32>, i32 -> vector<4x256xf32>
    %c2_36 = arith.constant 2 : index
    %c0_37 = arith.constant 0 : index
    %70 = vector.load %arg3[%c2_36, %c0_37] : memref<9x256xf32, #tpu.memory_space<vmem>>, vector<1x256xf32>
    %71 = vector.broadcast %70 : vector<1x256xf32> to vector<4x256xf32>
    %72 = arith.mulf %69, %71 : vector<4x256xf32>
    %73 = arith.truncf %72 : vector<4x256xf32> to vector<4x256xbf16>
    %c16_38 = arith.constant 16 : index
    %c256_39 = arith.constant 256 : index
    %74 = vector.load %arg5[%c16_38, %c256_39] : memref<72x512xbf16, #tpu.memory_space<vmem>>, vector<4x256xbf16>
    tpu.vector_store %arg5[%c16_38, %c256_39], %73 {strides = array<i32>} : memref<72x512xbf16, #tpu.memory_space<vmem>>, vector<4x256xbf16>,
    %c1_i32_40 = arith.constant 1 : i32
    %75 = tpu.dynamic_rotate %56 by %c1_i32_40 dim 1 : vector<4x256xf32>, i32 -> vector<4x256xf32>
    %c3_41 = arith.constant 3 : index
    %c0_42 = arith.constant 0 : index
    %76 = vector.load %arg3[%c3_41, %c0_42] : memref<9x256xf32, #tpu.memory_space<vmem>>, vector<1x256xf32>
    %77 = vector.broadcast %76 : vector<1x256xf32> to vector<4x256xf32>
    %78 = arith.mulf %75, %77 : vector<4x256xf32>
    %79 = arith.truncf %78 : vector<4x256xf32> to vector<4x256xbf16>
    %c24_43 = arith.constant 24 : index
    %c256_44 = arith.constant 256 : index
    %80 = vector.load %arg5[%c24_43, %c256_44] : memref<72x512xbf16, #tpu.memory_space<vmem>>, vector<4x256xbf16>
    tpu.vector_store %arg5[%c24_43, %c256_44], %79 {strides = array<i32>} : memref<72x512xbf16, #tpu.memory_space<vmem>>, vector<4x256xbf16>,
    %81 = arith.truncf %56 : vector<4x256xf32> to vector<4x256xbf16>
    %c32_45 = arith.constant 32 : index
    %c256_46 = arith.constant 256 : index
    %82 = vector.load %arg5[%c32_45, %c256_46] : memref<72x512xbf16, #tpu.memory_space<vmem>>, vector<4x256xbf16>
    tpu.vector_store %arg5[%c32_45, %c256_46], %81 {strides = array<i32>} : memref<72x512xbf16, #tpu.memory_space<vmem>>, vector<4x256xbf16>,
    %c255_i32_47 = arith.constant 255 : i32
    %83 = tpu.dynamic_rotate %56 by %c255_i32_47 dim 1 : vector<4x256xf32>, i32 -> vector<4x256xf32>
    %c5_48 = arith.constant 5 : index
    %c0_49 = arith.constant 0 : index
    %84 = vector.load %arg3[%c5_48, %c0_49] : memref<9x256xf32, #tpu.memory_space<vmem>>, vector<1x256xf32>
    %85 = vector.broadcast %84 : vector<1x256xf32> to vector<4x256xf32>
    %86 = arith.mulf %83, %85 : vector<4x256xf32>
    %87 = arith.truncf %86 : vector<4x256xf32> to vector<4x256xbf16>
    %c40_50 = arith.constant 40 : index
    %c256_51 = arith.constant 256 : index
    %88 = vector.load %arg5[%c40_50, %c256_51] : memref<72x512xbf16, #tpu.memory_space<vmem>>, vector<4x256xbf16>
    tpu.vector_store %arg5[%c40_50, %c256_51], %87 {strides = array<i32>} : memref<72x512xbf16, #tpu.memory_space<vmem>>, vector<4x256xbf16>,
    %c241_i32_52 = arith.constant 241 : i32
    %89 = tpu.dynamic_rotate %56 by %c241_i32_52 dim 1 : vector<4x256xf32>, i32 -> vector<4x256xf32>
    %c6_53 = arith.constant 6 : index
    %c0_54 = arith.constant 0 : index
    %90 = vector.load %arg3[%c6_53, %c0_54] : memref<9x256xf32, #tpu.memory_space<vmem>>, vector<1x256xf32>
    %91 = vector.broadcast %90 : vector<1x256xf32> to vector<4x256xf32>
    %92 = arith.mulf %89, %91 : vector<4x256xf32>
    %93 = arith.truncf %92 : vector<4x256xf32> to vector<4x256xbf16>
    %c48_55 = arith.constant 48 : index
    %c256_56 = arith.constant 256 : index
    %94 = vector.load %arg5[%c48_55, %c256_56] : memref<72x512xbf16, #tpu.memory_space<vmem>>, vector<4x256xbf16>
    tpu.vector_store %arg5[%c48_55, %c256_56], %93 {strides = array<i32>} : memref<72x512xbf16, #tpu.memory_space<vmem>>, vector<4x256xbf16>,
    %c240_i32_57 = arith.constant 240 : i32
    %95 = tpu.dynamic_rotate %56 by %c240_i32_57 dim 1 : vector<4x256xf32>, i32 -> vector<4x256xf32>
    %c7_58 = arith.constant 7 : index
    %c0_59 = arith.constant 0 : index
    %96 = vector.load %arg3[%c7_58, %c0_59] : memref<9x256xf32, #tpu.memory_space<vmem>>, vector<1x256xf32>
    %97 = vector.broadcast %96 : vector<1x256xf32> to vector<4x256xf32>
    %98 = arith.mulf %95, %97 : vector<4x256xf32>
    %99 = arith.truncf %98 : vector<4x256xf32> to vector<4x256xbf16>
    %c56_60 = arith.constant 56 : index
    %c256_61 = arith.constant 256 : index
    %100 = vector.load %arg5[%c56_60, %c256_61] : memref<72x512xbf16, #tpu.memory_space<vmem>>, vector<4x256xbf16>
    tpu.vector_store %arg5[%c56_60, %c256_61], %99 {strides = array<i32>} : memref<72x512xbf16, #tpu.memory_space<vmem>>, vector<4x256xbf16>,
    %c239_i32_62 = arith.constant 239 : i32
    %101 = tpu.dynamic_rotate %56 by %c239_i32_62 dim 1 : vector<4x256xf32>, i32 -> vector<4x256xf32>
    %c8_63 = arith.constant 8 : index
    %c0_64 = arith.constant 0 : index
    %102 = vector.load %arg3[%c8_63, %c0_64] : memref<9x256xf32, #tpu.memory_space<vmem>>, vector<1x256xf32>
    %103 = vector.broadcast %102 : vector<1x256xf32> to vector<4x256xf32>
    %104 = arith.mulf %101, %103 : vector<4x256xf32>
    %105 = arith.truncf %104 : vector<4x256xf32> to vector<4x256xbf16>
    %c64_65 = arith.constant 64 : index
    %c256_66 = arith.constant 256 : index
    %106 = vector.load %arg5[%c64_65, %c256_66] : memref<72x512xbf16, #tpu.memory_space<vmem>>, vector<4x256xbf16>
    tpu.vector_store %arg5[%c64_65, %c256_66], %105 {strides = array<i32>} : memref<72x512xbf16, #tpu.memory_space<vmem>>, vector<4x256xbf16>,
    %c0_67 = arith.constant 0 : index
    %c0_68 = arith.constant 0 : index
    %107 = vector.load %arg2[%c0_67, %c0_68] : memref<4x72xbf16, #tpu.memory_space<vmem>>, vector<4x72xbf16>
    %c0_69 = arith.constant 0 : index
    %c0_70 = arith.constant 0 : index
    %108 = vector.load %arg5[%c0_69, %c0_70] : memref<72x512xbf16, #tpu.memory_space<vmem>>, vector<72x512xbf16>
    %cst = arith.constant dense<0.000000e+00> : vector<4x512xf32>
    %109 = tpu.matmul %107, %108, %cst {dimension_numbers = #tpu.dot_dimension_numbers<[1], [0], [0], [1], [0, 0, 1, 1], [], []>} : vector<4x72xbf16>, vector<72x512xbf16>, vector<4x512xf32> -> vector<4x512xf32>
    %110 = vector.extract_strided_slice %109 {offsets = [0, 0], sizes = [4, 256], strides = [1, 1]} : vector<4x512xf32> to vector<4x256xf32>
    %cst_71 = arith.constant 0.000000e+00 : f32
    %111 = vector.broadcast %cst_71 : f32 to vector<4x256xf32>
    %112 = arith.cmpf ogt, %110, %111 : vector<4x256xf32>
    %cst_72 = arith.constant 0.00999999977 : f32
    %113 = vector.broadcast %cst_72 : f32 to vector<4x256xf32>
    %114 = arith.mulf %113, %110 : vector<4x256xf32>
    %115 = arith.select %112, %110, %114 : vector<4x256xi1>, vector<4x256xf32>
    %116 = arith.addf %4, %115 : vector<4x256xf32>
    %c0_73 = arith.constant 0 : index
    %c0_74 = arith.constant 0 : index
    %c0_75 = arith.constant 0 : index
    %117 = vector.load %arg4[%c0_73, %c0_74, %c0_75] : memref<2x4x256xf32, #tpu.memory_space<vmem>>, vector<1x4x256xf32>
    %118 = vector.shape_cast %117 : vector<1x4x256xf32> to vector<4x256xf32>
    %119 = vector.shape_cast %116 : vector<4x256xf32> to vector<1x4x256xf32>
    tpu.vector_store %arg4[%c0_73, %c0_74, %c0_75], %119 {strides = array<i32>} : memref<2x4x256xf32, #tpu.memory_space<vmem>>, vector<1x4x256xf32>,
    %120 = vector.extract_strided_slice %109 {offsets = [0, 256], sizes = [4, 256], strides = [1, 1]} : vector<4x512xf32> to vector<4x256xf32>
    %cst_76 = arith.constant 0.000000e+00 : f32
    %121 = vector.broadcast %cst_76 : f32 to vector<4x256xf32>
    %122 = arith.cmpf ogt, %120, %121 : vector<4x256xf32>
    %cst_77 = arith.constant 0.00999999977 : f32
    %123 = vector.broadcast %cst_77 : f32 to vector<4x256xf32>
    %124 = arith.mulf %123, %120 : vector<4x256xf32>
    %125 = arith.select %122, %120, %124 : vector<4x256xi1>, vector<4x256xf32>
    %126 = arith.addf %56, %125 : vector<4x256xf32>
    %c1_78 = arith.constant 1 : index
    %c0_79 = arith.constant 0 : index
    %c0_80 = arith.constant 0 : index
    %127 = vector.load %arg4[%c1_78, %c0_79, %c0_80] : memref<2x4x256xf32, #tpu.memory_space<vmem>>, vector<1x4x256xf32>
    %128 = vector.shape_cast %127 : vector<1x4x256xf32> to vector<4x256xf32>
    %129 = vector.shape_cast %126 : vector<4x256xf32> to vector<1x4x256xf32>
    tpu.vector_store %arg4[%c1_78, %c0_79, %c0_80], %129 {strides = array<i32>} : memref<2x4x256xf32, #tpu.memory_space<vmem>>, vector<1x4x256xf32>,
    return
  }
  func.func @transform_0(%arg0: i32) -> (i32, i32, i32) {
    %c0_i32 = arith.constant 0 : i32
    %c0_i32_0 = arith.constant 0 : i32
    %c0_i32_1 = arith.constant 0 : i32
    return %arg0, %c0_i32, %c0_i32_0 : i32, i32, i32
  }
  func.func @transform_1(%arg0: i32) -> (i32, i32) {
    %c0_i32 = arith.constant 0 : i32
    %c0_i32_0 = arith.constant 0 : i32
    %c0_i32_1 = arith.constant 0 : i32
    return %c0_i32, %c0_i32_0 : i32, i32
  }
  func.func @transform_2(%arg0: i32) -> (i32, i32) {
    %c0_i32 = arith.constant 0 : i32
    %c0_i32_0 = arith.constant 0 : i32
    %c0_i32_1 = arith.constant 0 : i32
    return %c0_i32, %c0_i32_0 : i32, i32
  }
  func.func @transform_3(%arg0: i32) -> (i32, i32, i32) {
    %c0_i32 = arith.constant 0 : i32
    %c0_i32_0 = arith.constant 0 : i32
    %c0_i32_1 = arith.constant 0 : i32
    return %arg0, %c0_i32, %c0_i32_0 : i32, i32, i32
  }
}

</mosaic_0001>

<llo_original>
// kernel: tpu_custom_call.1
$region0: #{tpu_custom_call.1}
  #allocation0 [shape = 'u32[]', space=smem, size = 0x4, offset = 0x4, fixed_abs, tag = 'smem constant byte address 0x4 - core index']
  #allocation1 [shape = 'u32[72,128]{1,0:T(1,128)}', space=vmem, size = 0x9000, scoped, tag = 'internal scratch']
  #allocation2 [shape = 'bf16[72,512]{1,0:T(8,128)(2,1)}', space=vmem, size = 0x12000, scoped, tag = 'scratch operand']
  %s0 = inlined_call_operand.hbm [shape: f32[2,4,256], index: 0, kind: input, shape index: {}]
  %s1 = inlined_call_operand.hbm [shape: bf16[4,72], index: 1, kind: input, shape index: {}]
  %s2 = inlined_call_operand.hbm [shape: f32[9,256], index: 2, kind: input, shape index: {}]
  %s3 = inlined_call_operand.hbm [shape: f32[2,4,256], index: 3, kind: output, shape index: {}]
  %s4 = sld [smem:[#allocation0]]
  $region38: #{tpu_custom_call.1} parent=0
    _
  %s6 = ssub.s32 1, %s4
  %s7 = scalar_select 0, %s6, %s4
  $region1: #{tpu_custom_call.1} parent=0
    #allocation3 [shape = 'u8[8192]{0}', space=vmem, size = 0x2000, scoped, tag = 'input window, operand 0, single buffered']
    #allocation4 [shape = 's32[1]{0}', space=sflag, size = 0x4, scoped, tag = 'scoped memory for tpu_custom_call.1']
    #allocation5 [shape = 's32[1]{0}', space=sflag, size = 0x4, scoped, tag = 'scoped memory for tpu_custom_call.1']
    #allocation6 [shape = 'u8[1024]{0}', space=vmem, size = 0x400, scoped, tag = 'input window, operand 1, single buffered']
    #allocation7 [shape = 's32[1]{0}', space=sflag, size = 0x4, scoped, tag = 'scoped memory for tpu_custom_call.1']
    #allocation8 [shape = 'u8[16384]{0}', space=vmem, size = 0x4000, scoped, tag = 'input window, operand 2, single buffered']
    #allocation9 [shape = 'u8[8192]{0}', space=vmem, size = 0x2000, scoped, tag = 'output window, operand 0, single buffered']
    %8 = vsyncpa [#allocation4], 0
    %9 = vsyncpa [#allocation7], 0
    %10 = vsyncpa [#allocation5], 0
    // Predicated region
    $region2: #{tpu_custom_call.1} parent=1 // pred_check
      _
    $region3: #{tpu_custom_call.1} parent=1 // pred_check_branch
      %12 = sbr.rel (0) target = $region5
    $region4: #{tpu_custom_call.1} parent=1 // pred_region
      %14 = vsyncadd [#allocation4], 0
      %s15 = sshll.u32 %s0, 4
      %s16 = int_to_ptr.hbm [resolvable:$true] %s15
      %s17 = sshll.u32 [#allocation3], 4
      %s18 = int_to_ptr.vmem [resolvable:$true] %s17
      %23 = dma.hbm_to_vmem [thread:$0]  %s16, 256, %s18, [#allocation4], 128, 128, 8
    $region5: #{tpu_custom_call.1} parent=1 // pred_fallthru
      _
    // Predicated region
    $region6: #{tpu_custom_call.1} parent=1 // pred_check
      _
    $region7: #{tpu_custom_call.1} parent=1 // pred_check_branch
      %25 = sbr.rel (0) target = $region9
    $region8: #{tpu_custom_call.1} parent=1 // pred_region
      %27 = vsyncadd [#allocation7], 0
      %s29 = sshll.u32 %s1, 4
      %s30 = int_to_ptr.hbm [resolvable:$true] %s29
      %s31 = sshll.u32 [#allocation6], 4
      %s32 = int_to_ptr.vmem [resolvable:$true] %s31
      %34 = dma.hbm_to_vmem [thread:$0]  %s30, 32, %s32, [#allocation7]
    $region9: #{tpu_custom_call.1} parent=1 // pred_fallthru
      _
    // Predicated region
    $region10: #{tpu_custom_call.1} parent=1 // pred_check
      _
    $region11: #{tpu_custom_call.1} parent=1 // pred_check_branch
      %36 = sbr.rel (0) target = $region13
    $region12: #{tpu_custom_call.1} parent=1 // pred_region
      %38 = vsyncadd [#allocation7], 0
      %s39 = sshll.u32 %s2, 4
      %s40 = int_to_ptr.hbm [resolvable:$true] %s39
      %s41 = sshll.u32 [#allocation8], 4
      %s42 = int_to_ptr.vmem [resolvable:$true] %s41
      %47 = dma.hbm_to_vmem [thread:$0]  %s40, 512, %s42, [#allocation7], 256, 256, 16
    $region13: #{tpu_custom_call.1} parent=1 // pred_fallthru
      _
    // Predicated region
    $region14: #{tpu_custom_call.1} parent=1 // pred_check
      _
    $region15: #{tpu_custom_call.1} parent=1 // pred_check_branch
      %49 = sbr.rel (0) target = $region17
    $region16: #{tpu_custom_call.1} parent=1 // pred_region
      %51 = dma.done [#allocation4], 256
    $region17: #{tpu_custom_call.1} parent=1 // pred_fallthru
      _
    // Predicated region
    $region18: #{tpu_custom_call.1} parent=1 // pred_check
      _
    $region19: #{tpu_custom_call.1} parent=1 // pred_check_branch
      %53 = sbr.rel (0) target = $region21
    $region20: #{tpu_custom_call.1} parent=1 // pred_region
      %55 = dma.done [#allocation7], 32
    $region21: #{tpu_custom_call.1} parent=1 // pred_fallthru
      _
    // Predicated region
    $region22: #{tpu_custom_call.1} parent=1 // pred_check
      _
    $region23: #{tpu_custom_call.1} parent=1 // pred_check_branch
      %57 = sbr.rel (0) target = $region25
    $region24: #{tpu_custom_call.1} parent=1 // pred_region
      %59 = dma.done [#allocation7], 512
    $region25: #{tpu_custom_call.1} parent=1 // pred_fallthru
      _
    %p61 = scmp.eq.s32.totalorder 0, 0
    // Predicated region
    $region26: #{tpu_custom_call.1} parent=1 // pred_check
      %p62 = pneg %p61
    $region27: #{tpu_custom_call.1} parent=1 // pred_check_branch
      %64 = sbr.rel (%p62) target = $region29
    $region28: #{tpu_custom_call.1} parent=1 // pred_region
      %65 = vst [vmem:[#allocation2] sm:$0xff] 0
      %66 = vst [vmem:[#allocation2 + $0x8] sm:$0xff] 0
      %67 = vst [vmem:[#allocation2 + $0x10] sm:$0xff] 0
      %68 = vst [vmem:[#allocation2 + $0x18] sm:$0xff] 0
      %69 = vst [vmem:[#allocation2 + $0x20] sm:$0xff] 0
      %70 = vst [vmem:[#allocation2 + $0x28] sm:$0xff] 0
      %71 = vst [vmem:[#allocation2 + $0x30] sm:$0xff] 0
      %72 = vst [vmem:[#allocation2 + $0x38] sm:$0xff] 0
      %73 = vst [vmem:[#allocation2 + $0x40] sm:$0xff] 0
      %74 = vst [vmem:[#allocation2 + $0x48] sm:$0xff] 0
      %75 = vst [vmem:[#allocation2 + $0x50] sm:$0xff] 0
      %76 = vst [vmem:[#allocation2 + $0x58] sm:$0xff] 0
      %77 = vst [vmem:[#allocation2 + $0x60] sm:$0xff] 0
      %78 = vst [vmem:[#allocation2 + $0x68] sm:$0xff] 0
      %79 = vst [vmem:[#allocation2 + $0x70] sm:$0xff] 0
      %80 = vst [vmem:[#allocation2 + $0x78] sm:$0xff] 0
      %81 = vst [vmem:[#allocation2 + $0x80] sm:$0xff] 0
      %82 = vst [vmem:[#allocation2 + $0x88] sm:$0xff] 0
    $region29: #{tpu_custom_call.1} parent=1 // pred_fallthru
      _
    %v83 = vld [vmem:[#allocation3] sm:$0xff]
    %85 = vst [vmem:[#allocation1] ss:$2 sm:$0xff] %v83
    %v86 = vld.sshfl [vmem:[#allocation1] sm:$0xff pattern:$0x75316420]
    %v87 = vld.sshfl [vmem:[#allocation1 + $0x8] sm:$0xff pattern:$0x75316420]
    %90 = vrot.lane.b32.xlu0 %v86, 17
    %v91 = vpop.permute.xlu0 %90
    %92 = vrot.lane.b32.xlu0 %v87, 17
    %v93 = vpop.permute.xlu0 %92
    %v94 = vlaneseq
    %v95 = vand.u32 %v94, 127
    %vm96 = vcmp.lt.s32.totalorder %v95, 17
    %v97 = vsel %vm96, %v91, %v93
    %v98 = vsel %vm96, %v93, %v91
    %v99 = vld [vmem:[#allocation8] ss:$8 sm:$0x3]
    %v101 = vperm.slane %v99, 0
    %v102 = vperm.slane %v99, 1
    %v105 = vmul.f32 %v98, %v101
    %v106 = vmul.f32 %v97, %v102
    %v107 = vpack.c.bf16 %v106, %v105
    %108 = vst [vmem:[#allocation2] sm:$0x33] %v107
    %109 = vst [vmem:[#allocation1] ss:$2 sm:$0xff] %v83
    %v110 = vld.sshfl [vmem:[#allocation1] sm:$0xff pattern:$0x75316420]
    %v111 = vld.sshfl [vmem:[#allocation1 + $0x8] sm:$0xff pattern:$0x75316420]
    %114 = vrot.lane.b32.xlu0 %v110, 16
    %v115 = vpop.permute.xlu0 %114
    %116 = vrot.lane.b32.xlu0 %v111, 16
    %v117 = vpop.permute.xlu0 %116
    %vm118 = vcmp.lt.s32.totalorder %v95, 16
    %v119 = vsel %vm118, %v115, %v117
    %v120 = vsel %vm118, %v117, %v115
    %s121 = scalar_lea.vmem [#allocation8], 1
    %v122 = vld [vmem:[%s121] ss:$8 sm:$0x3]
    %v124 = vperm.slane %v122, 0
    %v125 = vperm.slane %v122, 1
    %v128 = vmul.f32 %v120, %v124
    %v129 = vmul.f32 %v119, %v125
    %v130 = vpack.c.bf16 %v129, %v128
    %131 = vst [vmem:[#allocation2 + $0x10] sm:$0x33] %v130
    %132 = vst [vmem:[#allocation1] ss:$2 sm:$0xff] %v83
    %v133 = vld.sshfl [vmem:[#allocation1] sm:$0xff pattern:$0x75316420]
    %v134 = vld.sshfl [vmem:[#allocation1 + $0x8] sm:$0xff pattern:$0x75316420]
    %137 = vrot.lane.b32.xlu0 %v133, 15
    %v138 = vpop.permute.xlu0 %137
    %139 = vrot.lane.b32.xlu0 %v134, 15
    %v140 = vpop.permute.xlu0 %139
    %vm141 = vcmp.lt.s32.totalorder %v95, 15
    %v142 = vsel %vm141, %v138, %v140
    %v143 = vsel %vm141, %v140, %v138
    %s144 = scalar_lea.vmem [#allocation8], 2
    %v145 = vld [vmem:[%s144] ss:$8 sm:$0x3]
    %v147 = vperm.slane %v145, 0
    %v148 = vperm.slane %v145, 1
    %v151 = vmul.f32 %v143, %v147
    %v152 = vmul.f32 %v142, %v148
    %v153 = vpack.c.bf16 %v152, %v151
    %154 = vst [vmem:[#allocation2 + $0x20] sm:$0x33] %v153
    %155 = vst [vmem:[#allocation1] ss:$2 sm:$0xff] %v83
    %v156 = vld.sshfl [vmem:[#allocation1] sm:$0xff pattern:$0x75316420]
    %v157 = vld.sshfl [vmem:[#allocation1 + $0x8] sm:$0xff pattern:$0x75316420]
    %160 = vrot.lane.b32.xlu0 %v156, 1
    %v161 = vpop.permute.xlu0 %160
    %162 = vrot.lane.b32.xlu0 %v157, 1
    %v163 = vpop.permute.xlu0 %162
    %vm164 = vcmp.lt.s32.totalorder %v95, 1
    %v165 = vsel %vm164, %v161, %v163
    %v166 = vsel %vm164, %v163, %v161
    %s167 = scalar_lea.vmem [#allocation8], 3
    %v168 = vld [vmem:[%s167] ss:$8 sm:$0x3]
    %v170 = vperm.slane %v168, 0
    %v171 = vperm.slane %v168, 1
    %v174 = vmul.f32 %v166, %v170
    %v175 = vmul.f32 %v165, %v171
    %v176 = vpack.c.bf16 %v175, %v174
    %177 = vst [vmem:[#allocation2 + $0x30] sm:$0x33] %v176
    %178 = vst [vmem:[#allocation1] ss:$2 sm:$0xff] %v83
    %v179 = vld.sshfl [vmem:[#allocation1] sm:$0xff pattern:$0x75316420]
    %v180 = vld.sshfl [vmem:[#allocation1 + $0x8] sm:$0xff pattern:$0x75316420]
    %v183 = vpack.c.bf16 %v180, %v179
    %184 = vst [vmem:[#allocation2 + $0x40] sm:$0x33] %v183
    %185 = vst [vmem:[#allocation1] ss:$2 sm:$0xff] %v83
    %v186 = vld.sshfl [vmem:[#allocation1] sm:$0xff pattern:$0x75316420]
    %v187 = vld.sshfl [vmem:[#allocation1 + $0x8] sm:$0xff pattern:$0x75316420]
    %190 = vrot.lane.b32.xlu0 %v186, 127
    %v191 = vpop.permute.xlu0 %190
    %192 = vrot.lane.b32.xlu0 %v187, 127
    %v193 = vpop.permute.xlu0 %192
    %vm194 = vcmp.lt.s32.totalorder %v95, 127
    %v195 = vsel %vm194, %v191, %v193
    %v196 = vsel %vm194, %v193, %v191
    %s197 = scalar_lea.vmem [#allocation8], 5
    %v198 = vld [vmem:[%s197] ss:$8 sm:$0x3]
    %v200 = vperm.slane %v198, 0
    %v201 = vperm.slane %v198, 1
    %v204 = vmul.f32 %v195, %v200
    %v205 = vmul.f32 %v196, %v201
    %v206 = vpack.c.bf16 %v205, %v204
    %207 = vst [vmem:[#allocation2 + $0x50] sm:$0x33] %v206
    %208 = vst [vmem:[#allocation1] ss:$2 sm:$0xff] %v83
    %v209 = vld.sshfl [vmem:[#allocation1] sm:$0xff pattern:$0x75316420]
    %v210 = vld.sshfl [vmem:[#allocation1 + $0x8] sm:$0xff pattern:$0x75316420]
    %213 = vrot.lane.b32.xlu0 %v209, 113
    %v214 = vpop.permute.xlu0 %213
    %215 = vrot.lane.b32.xlu0 %v210, 113
    %v216 = vpop.permute.xlu0 %215
    %vm217 = vcmp.lt.s32.totalorder %v95, 113
    %v218 = vsel %vm217, %v214, %v216
    %v219 = vsel %vm217, %v216, %v214
    %s220 = scalar_lea.vmem [#allocation8], 6
    %v221 = vld [vmem:[%s220] ss:$8 sm:$0x3]
    %v223 = vperm.slane %v221, 0
    %v224 = vperm.slane %v221, 1
    %v227 = vmul.f32 %v218, %v223
    %v228 = vmul.f32 %v219, %v224
    %v229 = vpack.c.bf16 %v228, %v227
    %230 = vst [vmem:[#allocation2 + $0x60] sm:$0x33] %v229
    %231 = vst [vmem:[#allocation1] ss:$2 sm:$0xff] %v83
    %v232 = vld.sshfl [vmem:[#allocation1] sm:$0xff pattern:$0x75316420]
    %v233 = vld.sshfl [vmem:[#allocation1 + $0x8] sm:$0xff pattern:$0x75316420]
    %236 = vrot.lane.b32.xlu0 %v232, 112
    %v237 = vpop.permute.xlu0 %236
    %238 = vrot.lane.b32.xlu0 %v233, 112
    %v239 = vpop.permute.xlu0 %238
    %vm240 = vcmp.lt.s32.totalorder %v95, 112
    %v241 = vsel %vm240, %v237, %v239
    %v242 = vsel %vm240, %v239, %v237
    %s243 = scalar_lea.vmem [#allocation8], 7
    %v244 = vld [vmem:[%s243] ss:$8 sm:$0x3]
    %v246 = vperm.slane %v244, 0
    %v247 = vperm.slane %v244, 1
    %v250 = vmul.f32 %v241, %v246
    %v251 = vmul.f32 %v242, %v247
    %v252 = vpack.c.bf16 %v251, %v250
    %253 = vst [vmem:[#allocation2 + $0x70] sm:$0x33] %v252
    %254 = vst [vmem:[#allocation1] ss:$2 sm:$0xff] %v83
    %v255 = vld.sshfl [vmem:[#allocation1] sm:$0xff pattern:$0x75316420]
    %v256 = vld.sshfl [vmem:[#allocation1 + $0x8] sm:$0xff pattern:$0x75316420]
    %259 = vrot.lane.b32.xlu0 %v255, 111
    %v260 = vpop.permute.xlu0 %259
    %261 = vrot.lane.b32.xlu0 %v256, 111
    %v262 = vpop.permute.xlu0 %261
    %vm263 = vcmp.lt.s32.totalorder %v95, 111
    %v264 = vsel %vm263, %v260, %v262
    %v265 = vsel %vm263, %v262, %v260
    %s266 = scalar_lea.vmem [#allocation8], 16
    %v267 = vld [vmem:[%s266] ss:$8 sm:$0x3]
    %v269 = vperm.slane %v267, 0
    %v270 = vperm.slane %v267, 1
    %v273 = vmul.f32 %v264, %v269
    %v274 = vmul.f32 %v265, %v270
    %v275 = vpack.c.bf16 %v274, %v273
    %276 = vst [vmem:[#allocation2 + $0x80] sm:$0x33] %v275
    %s277 = scalar_lea.vmem [#allocation3], 8
    %v278 = vld [vmem:[%s277] sm:$0xff]
    %280 = vst [vmem:[#allocation1] ss:$2 sm:$0xff] %v278
    %v281 = vld.sshfl [vmem:[#allocation1] sm:$0xff pattern:$0x75316420]
    %v282 = vld.sshfl [vmem:[#allocation1 + $0x8] sm:$0xff pattern:$0x75316420]
    %285 = vrot.lane.b32.xlu0 %v281, 17
    %v286 = vpop.permute.xlu0 %285
    %287 = vrot.lane.b32.xlu0 %v282, 17
    %v288 = vpop.permute.xlu0 %287
    %v289 = vsel %vm96, %v286, %v288
    %v290 = vsel %vm96, %v288, %v286
    %v291 = vld [vmem:[#allocation8] ss:$8 sm:$0x3]
    %v293 = vperm.slane %v291, 0
    %v294 = vperm.slane %v291, 1
    %v297 = vmul.f32 %v290, %v293
    %v298 = vmul.f32 %v289, %v294
    %v299 = vpack.c.bf16 %v298, %v297
    %300 = vst [vmem:[#allocation2 + $0x8] sm:$0x33] %v299
    %301 = vst [vmem:[#allocation1] ss:$2 sm:$0xff] %v278
    %v302 = vld.sshfl [vmem:[#allocation1] sm:$0xff pattern:$0x75316420]
    %v303 = vld.sshfl [vmem:[#allocation1 + $0x8] sm:$0xff pattern:$0x75316420]
    %306 = vrot.lane.b32.xlu0 %v302, 16
    %v307 = vpop.permute.xlu0 %306
    %308 = vrot.lane.b32.xlu0 %v303, 16
    %v309 = vpop.permute.xlu0 %308
    %v310 = vsel %vm118, %v307, %v309
    %v311 = vsel %vm118, %v309, %v307
    %v312 = vld [vmem:[%s121] ss:$8 sm:$0x3]
    %v314 = vperm.slane %v312, 0
    %v315 = vperm.slane %v312, 1
    %v318 = vmul.f32 %v311, %v314
    %v319 = vmul.f32 %v310, %v315
    %v320 = vpack.c.bf16 %v319, %v318
    %321 = vst [vmem:[#allocation2 + $0x18] sm:$0x33] %v320
    %322 = vst [vmem:[#allocation1] ss:$2 sm:$0xff] %v278
    %v323 = vld.sshfl [vmem:[#allocation1] sm:$0xff pattern:$0x75316420]
    %v324 = vld.sshfl [vmem:[#allocation1 + $0x8] sm:$0xff pattern:$0x75316420]
    %327 = vrot.lane.b32.xlu0 %v323, 15
    %v328 = vpop.permute.xlu0 %327
    %329 = vrot.lane.b32.xlu0 %v324, 15
    %v330 = vpop.permute.xlu0 %329
    %v331 = vsel %vm141, %v328, %v330
    %v332 = vsel %vm141, %v330, %v328
    %v333 = vld [vmem:[%s144] ss:$8 sm:$0x3]
    %v335 = vperm.slane %v333, 0
    %v336 = vperm.slane %v333, 1
    %v339 = vmul.f32 %v332, %v335
    %v340 = vmul.f32 %v331, %v336
    %v341 = vpack.c.bf16 %v340, %v339
    %342 = vst [vmem:[#allocation2 + $0x28] sm:$0x33] %v341
    %343 = vst [vmem:[#allocation1] ss:$2 sm:$0xff] %v278
    %v344 = vld.sshfl [vmem:[#allocation1] sm:$0xff pattern:$0x75316420]
    %v345 = vld.sshfl [vmem:[#allocation1 + $0x8] sm:$0xff pattern:$0x75316420]
    %348 = vrot.lane.b32.xlu0 %v344, 1
    %v349 = vpop.permute.xlu0 %348
    %350 = vrot.lane.b32.xlu0 %v345, 1
    %v351 = vpop.permute.xlu0 %350
    %v352 = vsel %vm164, %v349, %v351
    %v353 = vsel %vm164, %v351, %v349
    %v354 = vld [vmem:[%s167] ss:$8 sm:$0x3]
    %v356 = vperm.slane %v354, 0
    %v357 = vperm.slane %v354, 1
    %v360 = vmul.f32 %v353, %v356
    %v361 = vmul.f32 %v352, %v357
    %v362 = vpack.c.bf16 %v361, %v360
    %363 = vst [vmem:[#allocation2 + $0x38] sm:$0x33] %v362
    %364 = vst [vmem:[#allocation1] ss:$2 sm:$0xff] %v278
    %v365 = vld.sshfl [vmem:[#allocation1] sm:$0xff pattern:$0x75316420]
    %v366 = vld.sshfl [vmem:[#allocation1 + $0x8] sm:$0xff pattern:$0x75316420]
    %v369 = vpack.c.bf16 %v366, %v365
    %370 = vst [vmem:[#allocation2 + $0x48] sm:$0x33] %v369
    %371 = vst [vmem:[#allocation1] ss:$2 sm:$0xff] %v278
    %v372 = vld.sshfl [vmem:[#allocation1] sm:$0xff pattern:$0x75316420]
    %v373 = vld.sshfl [vmem:[#allocation1 + $0x8] sm:$0xff pattern:$0x75316420]
    %376 = vrot.lane.b32.xlu0 %v372, 127
    %v377 = vpop.permute.xlu0 %376
    %378 = vrot.lane.b32.xlu0 %v373, 127
    %v379 = vpop.permute.xlu0 %378
    %v380 = vsel %vm194, %v377, %v379
    %v381 = vsel %vm194, %v379, %v377
    %v382 = vld [vmem:[%s197] ss:$8 sm:$0x3]
    %v384 = vperm.slane %v382, 0
    %v385 = vperm.slane %v382, 1
    %v388 = vmul.f32 %v380, %v384
    %v389 = vmul.f32 %v381, %v385
    %v390 = vpack.c.bf16 %v389, %v388
    %391 = vst [vmem:[#allocation2 + $0x58] sm:$0x33] %v390
    %392 = vst [vmem:[#allocation1] ss:$2 sm:$0xff] %v278
    %v393 = vld.sshfl [vmem:[#allocation1] sm:$0xff pattern:$0x75316420]
    %v394 = vld.sshfl [vmem:[#allocation1 + $0x8] sm:$0xff pattern:$0x75316420]
    %397 = vrot.lane.b32.xlu0 %v393, 113
    %v398 = vpop.permute.xlu0 %397
    %399 = vrot.lane.b32.xlu0 %v394, 113
    %v400 = vpop.permute.xlu0 %399
    %v401 = vsel %vm217, %v398, %v400
    %v402 = vsel %vm217, %v400, %v398
    %v403 = vld [vmem:[%s220] ss:$8 sm:$0x3]
    %v405 = vperm.slane %v403, 0
    %v406 = vperm.slane %v403, 1
    %v409 = vmul.f32 %v401, %v405
    %v410 = vmul.f32 %v402, %v406
    %v411 = vpack.c.bf16 %v410, %v409
    %412 = vst [vmem:[#allocation2 + $0x68] sm:$0x33] %v411
    %413 = vst [vmem:[#allocation1] ss:$2 sm:$0xff] %v278
    %v414 = vld.sshfl [vmem:[#allocation1] sm:$0xff pattern:$0x75316420]
    %v415 = vld.sshfl [vmem:[#allocation1 + $0x8] sm:$0xff pattern:$0x75316420]
    %418 = vrot.lane.b32.xlu0 %v414, 112
    %v419 = vpop.permute.xlu0 %418
    %420 = vrot.lane.b32.xlu0 %v415, 112
    %v421 = vpop.permute.xlu0 %420
    %v422 = vsel %vm240, %v419, %v421
    %v423 = vsel %vm240, %v421, %v419
    %v424 = vld [vmem:[%s243] ss:$8 sm:$0x3]
    %v426 = vperm.slane %v424, 0
    %v427 = vperm.slane %v424, 1
    %v430 = vmul.f32 %v422, %v426
    %v431 = vmul.f32 %v423, %v427
    %v432 = vpack.c.bf16 %v431, %v430
    %433 = vst [vmem:[#allocation2 + $0x78] sm:$0x33] %v432
    %434 = vst [vmem:[#allocation1] ss:$2 sm:$0xff] %v278
    %v435 = vld.sshfl [vmem:[#allocation1] sm:$0xff pattern:$0x75316420]
    %v436 = vld.sshfl [vmem:[#allocation1 + $0x8] sm:$0xff pattern:$0x75316420]
    %439 = vrot.lane.b32.xlu0 %v435, 111
    %v440 = vpop.permute.xlu0 %439
    %441 = vrot.lane.b32.xlu0 %v436, 111
    %v442 = vpop.permute.xlu0 %441
    %v443 = vsel %vm263, %v440, %v442
    %v444 = vsel %vm263, %v442, %v440
    %v445 = vld [vmem:[%s266] ss:$8 sm:$0x3]
    %v447 = vperm.slane %v445, 0
    %v448 = vperm.slane %v445, 1
    %v451 = vmul.f32 %v443, %v447
    %v452 = vmul.f32 %v444, %v448
    %v453 = vpack.c.bf16 %v452, %v451
    %454 = vst [vmem:[#allocation2 + $0x88] sm:$0x33] %v453
    %v455 = vld [vmem:[#allocation6] sm:$0x3]
    %v456 = vld [vmem:[#allocation2] sm:$0xff]
    %v457 = vld [vmem:[#allocation2 + $0x8] sm:$0xff]
    %v458 = vld [vmem:[#allocation2 + $0x10] sm:$0xff]
    %v459 = vld [vmem:[#allocation2 + $0x18] sm:$0xff]
    %v460 = vld [vmem:[#allocation2 + $0x20] sm:$0xff]
    %v461 = vld [vmem:[#allocation2 + $0x28] sm:$0xff]
    %v462 = vld [vmem:[#allocation2 + $0x30] sm:$0xff]
    %v463 = vld [vmem:[#allocation2 + $0x38] sm:$0xff]
    %v464 = vld [vmem:[#allocation2 + $0x40] sm:$0xff]
    %v465 = vld [vmem:[#allocation2 + $0x48] sm:$0xff]
    %v466 = vld [vmem:[#allocation2 + $0x50] sm:$0xff]
    %v467 = vld [vmem:[#allocation2 + $0x58] sm:$0xff]
    %v468 = vld [vmem:[#allocation2 + $0x60] sm:$0xff]
    %v469 = vld [vmem:[#allocation2 + $0x68] sm:$0xff]
    %v470 = vld [vmem:[#allocation2 + $0x70] sm:$0xff]
    %v471 = vld [vmem:[#allocation2 + $0x78] sm:$0xff]
    %v472 = vld [vmem:[#allocation2 + $0x80] sm:$0xff]
    %v473 = vld [vmem:[#allocation2 + $0x88] sm:$0xff]
    %v492 = vunpack.c.l.b16 %v456
    %v493 = vunpack.c.h.b16 %v456
    %v494 = vunpack.c.l.b16 %v457
    %v495 = vunpack.c.h.b16 %v457
    %v496 = vunpack.c.l.b16 %v458
    %v497 = vunpack.c.h.b16 %v458
    %v498 = vunpack.c.l.b16 %v459
    %v499 = vunpack.c.h.b16 %v459
    %v500 = vunpack.c.l.b16 %v460
    %v501 = vunpack.c.h.b16 %v460
    %v502 = vunpack.c.l.b16 %v461
    %v503 = vunpack.c.h.b16 %v461
    %v504 = vunpack.c.l.b16 %v462
    %v505 = vunpack.c.h.b16 %v462
    %v506 = vunpack.c.l.b16 %v463
    %v507 = vunpack.c.h.b16 %v463
    %v508 = vunpack.c.l.b16 %v464
    %v509 = vunpack.c.h.b16 %v464
    %v510 = vunpack.c.l.b16 %v465
    %v511 = vunpack.c.h.b16 %v465
    %v512 = vunpack.c.l.b16 %v466
    %v513 = vunpack.c.h.b16 %v466
    %v514 = vunpack.c.l.b16 %v467
    %v515 = vunpack.c.h.b16 %v467
    %v516 = vunpack.c.l.b16 %v468
    %v517 = vunpack.c.h.b16 %v468
    %v518 = vunpack.c.l.b16 %v469
    %v519 = vunpack.c.h.b16 %v469
    %v520 = vunpack.c.l.b16 %v470
    %v521 = vunpack.c.h.b16 %v470
    %v522 = vunpack.c.l.b16 %v471
    %v523 = vunpack.c.h.b16 %v471
    %v524 = vunpack.c.l.b16 %v472
    %v525 = vunpack.c.h.b16 %v472
    %v526 = vunpack.c.l.b16 %v473
    %v527 = vunpack.c.h.b16 %v473
    %v528 = vpack.c.b16 %v496, %v492
    %v529 = vpack.c.b16 %v497, %v493
    %v530 = vpack.c.b16 %v498, %v494
    %v531 = vpack.c.b16 %v499, %v495
    %v532 = vpack.c.b16 %v504, %v500
    %v533 = vpack.c.b16 %v505, %v501
    %v534 = vpack.c.b16 %v506, %v502
    %v535 = vpack.c.b16 %v507, %v503
    %v536 = vpack.c.b16 %v512, %v508
    %v537 = vpack.c.b16 %v513, %v509
    %v538 = vpack.c.b16 %v514, %v510
    %v539 = vpack.c.b16 %v515, %v511
    %v540 = vpack.c.b16 %v520, %v516
    %v541 = vpack.c.b16 %v521, %v517
    %v542 = vpack.c.b16 %v522, %v518
    %v543 = vpack.c.b16 %v523, %v519
    %v544 = vpack.c.b16 %v524, %v524
    %v545 = vpack.c.b16 %v525, %v525
    %v546 = vpack.c.b16 %v526, %v526
    %v547 = vpack.c.b16 %v527, %v527
    %vm564 = vcmask 588800
    %v566 = vsel %vm564, %v455, 0
    %vm568 = vcmask 1043456
    %v570 = vsel %vm568, %v544, 0
    %v573 = vsel %vm568, %v545, 0
    %v576 = vsel %vm568, %v546, 0
    %v579 = vsel %vm568, %v547, 0
    %581 = vmatpush.bf16.msra.mxu0 0
    %582 = vmatpush.bf16.msra.mxu0 0
    %583 = vmatpush.bf16.msra.mxu0 0
    %584 = vmatpush.bf16.msra.mxu0 %v570
    %585 = vmatpush.bf16.msra.mxu0 %v540
    %586 = vmatpush.bf16.msra.mxu0 %v536
    %587 = vmatpush.bf16.msra.mxu0 %v532
    %588 = vmatpush.bf16.msra.mxu0 %v528
    %589 = vmatmul.bf16.gmra.mxu0 %v566
    %v590 = vpop.f32.mrf.mxu0
    %v591 = vadd.f32 0.0, %v590
    %v592 = vpop.f32.mrf.mxu0
    %593 = vdwg.mxu0
    %594 = vmatpush.bf16.msra.mxu0 0
    %595 = vmatpush.bf16.msra.mxu0 0
    %596 = vmatpush.bf16.msra.mxu0 0
    %597 = vmatpush.bf16.msra.mxu0 %v573
    %598 = vmatpush.bf16.msra.mxu0 %v541
    %599 = vmatpush.bf16.msra.mxu0 %v537
    %600 = vmatpush.bf16.msra.mxu0 %v533
    %601 = vmatpush.bf16.msra.mxu0 %v529
    %602 = vmatmul.bf16.gmra.mxu0 %v566
    %v603 = vpop.f32.mrf.mxu0
    %v604 = vadd.f32 0.0, %v603
    %v605 = vpop.f32.mrf.mxu0
    %606 = vdwg.mxu0
    %607 = vmatpush.bf16.msra.mxu0 0
    %608 = vmatpush.bf16.msra.mxu0 0
    %609 = vmatpush.bf16.msra.mxu0 0
    %610 = vmatpush.bf16.msra.mxu0 %v576
    %611 = vmatpush.bf16.msra.mxu0 %v542
    %612 = vmatpush.bf16.msra.mxu0 %v538
    %613 = vmatpush.bf16.msra.mxu0 %v534
    %614 = vmatpush.bf16.msra.mxu0 %v530
    %615 = vmatmul.bf16.gmra.mxu0 %v566
    %v616 = vpop.f32.mrf.mxu0
    %v617 = vadd.f32 0.0, %v616
    %v618 = vpop.f32.mrf.mxu0
    %619 = vdwg.mxu0
    %620 = vmatpush.bf16.msra.mxu0 0
    %621 = vmatpush.bf16.msra.mxu0 0
    %622 = vmatpush.bf16.msra.mxu0 0
    %623 = vmatpush.bf16.msra.mxu0 %v579
    %624 = vmatpush.bf16.msra.mxu0 %v543
    %625 = vmatpush.bf16.msra.mxu0 %v539
    %626 = vmatpush.bf16.msra.mxu0 %v535
    %627 = vmatpush.bf16.msra.mxu0 %v531
    %628 = vmatmul.bf16.gmra.mxu0 %v566
    %v629 = vpop.f32.mrf.mxu0
    %v630 = vadd.f32 0.0, %v629
    %v631 = vpop.f32.mrf.mxu0
    %632 = vdwg.mxu0
    %vm633 = vcmp.gt.f32.partialorder %v591, 0.0
    %vm634 = vcmp.gt.f32.partialorder %v604, 0.0
    %v635 = vmul.f32 %v591, 0.01
    %v636 = vmul.f32 %v604, 0.01
    %v637 = vsel %vm633, %v591, %v635
    %v638 = vsel %vm634, %v604, %v636
    %v641 = vrot.slane %v638, 4
    %v642 = vsel %vm568, %v637, %v641
    %v644 = vadd.f32 %v83, %v642
    %645 = vst [vmem:[#allocation9] sm:$0xff] %v644
    %vm646 = vcmp.gt.f32.partialorder %v617, 0.0
    %vm647 = vcmp.gt.f32.partialorder %v630, 0.0
    %v648 = vmul.f32 %v617, 0.01
    %v649 = vmul.f32 %v630, 0.01
    %v650 = vsel %vm646, %v617, %v648
    %v651 = vsel %vm647, %v630, %v649
    %v654 = vrot.slane %v651, 4
    %v655 = vsel %vm568, %v650, %v654
    %v657 = vadd.f32 %v278, %v655
    %s658 = scalar_lea.vmem [#allocation9], 8
    %659 = vst [vmem:[%s658] sm:$0xff] %v657
    // Predicated region
    $region30: #{tpu_custom_call.1} parent=1 // pred_check
      _
    $region31: #{tpu_custom_call.1} parent=1 // pred_check_branch
      %661 = sbr.rel (0) target = $region33
    $region32: #{tpu_custom_call.1} parent=1 // pred_region
      %663 = vsyncadd [#allocation5], 0
      %s664 = sshll.u32 [#allocation9], 4
      %s665 = int_to_ptr.vmem [resolvable:$true] %s664
      %s666 = sshll.u32 %s3, 4
      %s667 = int_to_ptr.hbm [resolvable:$true] %s666
      %672 = dma.vmem_to_hbm [thread:$0]  %s665, 256, %s667, [#allocation5], 128, 128, 8
    $region33: #{tpu_custom_call.1} parent=1 // pred_fallthru
      _
    // Predicated region
    $region34: #{tpu_custom_call.1} parent=1 // pred_check
      _
    $region35: #{tpu_custom_call.1} parent=1 // pred_check_branch
      %674 = sbr.rel (0) target = $region37
    $region36: #{tpu_custom_call.1} parent=1 // pred_region
      %676 = dma.done [#allocation5], 256
    $region37: #{tpu_custom_call.1} parent=1 // pred_fallthru
      _
    %677 = vsyncpa [#allocation4], 1
    %678 = vsyncpa [#allocation7], 1
    %679 = vsyncpa [#allocation5], 1

</llo_original>
